<compile_context>
chip_gen: v7x
topology: tpu7x:2x2x1
jax: 0.10.0
libtpu: 0.0.40
codegen_flags: <defaults>
</compile_context>

<pallas_src>
import jax
import jax.numpy as jnp
from jax.experimental import pallas as pl
from jax.experimental.pallas import tpu as pltpu


def _round_up(x, m):
    return ((x + m - 1) // m) * m


def _mlp_encoder_kernel(x_ref, w1_ref, b1_ref, w2_ref, b2_ref, o_ref):
    # x_ref:  (TB, F)  f32      w1_ref: (F,  Hp) bf16   b1_ref: (1, Hp) f32
    #                           w2_ref: (Hp, H ) bf16   b2_ref: (1, H ) f32
    # o_ref:  (TB, H)  f32      (H = n_hidden, Hp = lane-padded hidden dim)
    x = x_ref[...].astype(jnp.bfloat16)

    # Layer 1: bf16 x bf16 on the MXU, f32 accumulate; bias + tanh in f32.
    # Padded hidden columns see weight 0 / bias 0 -> tanh(0) = 0.
    h1 = jnp.dot(x, w1_ref[...], preferred_element_type=jnp.float32)
    h1 = jnp.tanh(h1 + b1_ref[...])

    # Layer 2: only the n_hidden real output columns are computed/stored
    # (w2 is padded on the contraction axis only; padded rows are zero).
    h2 = jnp.dot(h1.astype(jnp.bfloat16), w2_ref[...],
                 preferred_element_type=jnp.float32)
    h2 = jnp.tanh(h2 + b2_ref[...])

    o_ref[...] = h2.astype(o_ref.dtype)


def _forward_impl(x, w1p, b1p, w2p, b2p, *, single_buffer_weights):
    seq, B, F = x.shape
    Hp = w1p.shape[1]          # padded hidden (contraction dim of layer 2)
    H = w2p.shape[1]           # true n_hidden (output width)

    # Batch tile (review #3/#4): large enough to amortize per-step overhead
    # and reach HBM streaming efficiency, but a function of B so big batches
    # split into >= 4 tiles for the "parallel" axis (v7x dual-TC sharding).
    TB = min(1024, _round_up(pl.cdiv(B, 4), 16))
    grid = (pl.cdiv(B, TB),)

    if single_buffer_weights:
        # Constant index_map -> never re-fetched across batch tiles; a second
        # buffer is pure VMEM waste (review #5).
        w_kwargs = dict(pipeline_mode=pl.Buffered(1))
    else:
        w_kwargs = {}

    def const_spec(shape):
        return pl.BlockSpec(shape, lambda i: (0, 0), **w_kwargs)

    flops = 2 * B * Hp * (F + H)
    bytes_accessed = (B * F * 4                 # last-timestep x slice
                      + (F * Hp + Hp * H) * 2   # bf16 weights (read once)
                      + (Hp + H) * 4            # biases
                      + B * H * 4)              # unpadded f32 output

    return pl.pallas_call(
        _mlp_encoder_kernel,
        out_shape=jax.ShapeDtypeStruct((B, H), x.dtype),
        grid=grid,
        in_specs=[
            # Read the last timestep straight out of HBM: seq dim squeezed
            # (block size 1) and pinned at block index seq-1.
            pl.BlockSpec((None, TB, F), lambda i: (seq - 1, i, 0)),
            # Weights / biases: constant index_map -> VMEM-resident across
            # all batch tiles (no re-DMA).
            const_spec((F, Hp)),
            const_spec((1, Hp)),
            const_spec((Hp, H)),
            const_spec((1, H)),
        ],
        # H == full array dim, so a <128-lane last dim is legal; the masked
        # vst path is nowhere near saturating the store slot at these shapes.
        out_specs=pl.BlockSpec((TB, H), lambda i: (i, 0)),
        compiler_params=pltpu.CompilerParams(
            dimension_semantics=("parallel",)),
        cost_estimate=pl.CostEstimate(
            flops=flops,
            transcendentals=B * (Hp + H),
            bytes_accessed=bytes_accessed),
    )(x, w1p, b1p, w2p, b2p)


def mlp_encoder_forward(x, w1p, b1p, w2p, b2p):
    """x: (seq, batch, n_features) float32.  Params from init_params.
    Returns (batch, n_hidden) float32 — same as MLPEncoder.forward in eval."""
    try:
        return _forward_impl(x, w1p, b1p, w2p, b2p, single_buffer_weights=True)
    except Exception:
        # Compatibility fallback: pl.Buffered(1) (single-buffered constant
        # weights) is a newer Pallas feature; numerics are identical with the
        # default double-buffering, only VMEM use differs.
        return _forward_impl(x, w1p, b1p, w2p, b2p, single_buffer_weights=False)


def init_params(key, n_features, n_hidden):
    """Matches torch init: weight ~ N(0, std=0.001), bias = 0.

    Weights stored (in, out).  The hidden *contraction* dim is zero-padded:
    to a multiple of 128 lanes while n_hidden <= 128 (fills v5e's 128-wide
    MXU exactly), to a multiple of 256 beyond that (v6e/v7x 2x256^2 MXUs).
    w2/b2 keep their true n_hidden output width so the kernel output needs
    no padding or wrapper slice.  Weights kept in bf16 in HBM (halves weight
    DMA; in-kernel accumulation is f32)."""
    if n_hidden <= 128:
        Hp = _round_up(max(n_hidden, 1), 128)
    else:
        Hp = _round_up(n_hidden, 256)

    k1, k2 = jax.random.split(key)
    w1 = jax.random.normal(k1, (n_features, n_hidden), jnp.float32) * 0.001
    w2 = jax.random.normal(k2, (n_hidden, n_hidden), jnp.float32) * 0.001

    w1p = jnp.zeros((n_features, Hp), jnp.float32).at[:, :n_hidden].set(w1)
    w2p = jnp.zeros((Hp, n_hidden), jnp.float32).at[:n_hidden, :].set(w2)
    b1p = jnp.zeros((1, Hp), jnp.float32)
    b2p = jnp.zeros((1, n_hidden), jnp.float32)
    return w1p.astype(jnp.bfloat16), b1p, w2p.astype(jnp.bfloat16), b2p


if __name__ == "__main__":
    key = jax.random.PRNGKey(0)
    seq, batch, n_features, n_hidden = 8, 2, 16, 32

    kx, kp = jax.random.split(key)
    x = jax.random.normal(kx, (seq, batch, n_features), dtype=jnp.float32)
    w1p, b1p, w2p, b2p = init_params(kp, n_features, n_hidden)

    def reference(xs):
        # Pure-JAX reference with identical numerics (bf16 MXU operands,
        # f32 accumulation, eval-mode dropout = identity).
        x_last = xs[-1, :, :].astype(jnp.bfloat16)
        h1 = jnp.tanh(
            jnp.dot(x_last, w1p, preferred_element_type=jnp.float32) + b1p)
        h2 = jnp.tanh(
            jnp.dot(h1.astype(jnp.bfloat16), w2p,
                    preferred_element_type=jnp.float32) + b2p)
        return h2

    out = jax.block_until_ready(mlp_encoder_forward(x, w1p, b1p, w2p, b2p))
    assert out.shape == (batch, n_hidden)
    ref = reference(x)
    assert jnp.allclose(out, ref, atol=1e-5, rtol=1e-3), (
        float(jnp.max(jnp.abs(out - ref))))

    # Ragged / multi-tile check: B not a multiple of TB and grid > 1
    # (exercises masked output stores and OOB x reads on the last tile).
    big_b = 200
    xb = jax.random.normal(jax.random.PRNGKey(1), (seq, big_b, n_features),
                           dtype=jnp.float32)
    outb = jax.block_until_ready(mlp_encoder_forward(xb, w1p, b1p, w2p, b2p))
    refb = reference(xb)
    assert outb.shape == (big_b, n_hidden)
    assert jnp.allclose(outb, refb, atol=1e-5, rtol=1e-3), (
        float(jnp.max(jnp.abs(outb - refb))))

    print("KERNEL_OK")
</pallas_src>

<mosaic_0001>
module attributes {stable_mosaic.version = 11 : i64} {
  func.func @_mlp_encoder_kernel(%arg0: i32, %arg1: memref<1x16x16xf32, #tpu.memory_space<vmem>>, %arg2: memref<16x128xbf16, #tpu.memory_space<vmem>>, %arg3: memref<1x128xf32, #tpu.memory_space<vmem>>, %arg4: memref<128x32xbf16, #tpu.memory_space<vmem>>, %arg5: memref<1x32xf32, #tpu.memory_space<vmem>>, %arg6: memref<16x32xf32, #tpu.memory_space<vmem>>) attributes {dimension_semantics = [#tpu.dimension_semantics<parallel>], iteration_bounds = array<i64: 1>, scalar_prefetch = 0 : i64, scratch_operands = 0 : i64, tpu.core_type = #tpu.core_type<tc>, window_params = [{transform_indices = @transform_0, window_bounds = array<i64: 1, 16, 16>}, {pipeline_mode = #tpu.pipeline_mode<synchronous>, transform_indices = @transform_1, window_bounds = array<i64: 16, 128>}, {pipeline_mode = #tpu.pipeline_mode<synchronous>, transform_indices = @transform_2, window_bounds = array<i64: 1, 128>}, {pipeline_mode = #tpu.pipeline_mode<synchronous>, transform_indices = @transform_3, window_bounds = array<i64: 128, 32>}, {pipeline_mode = #tpu.pipeline_mode<synchronous>, transform_indices = @transform_4, window_bounds = array<i64: 1, 32>}, {transform_indices = @transform_5, window_bounds = array<i64: 16, 32>}]} {
    %c0 = arith.constant 0 : index
    %c0_0 = arith.constant 0 : index
    %c0_1 = arith.constant 0 : index
    %0 = vector.load %arg1[%c0, %c0_0, %c0_1] : memref<1x16x16xf32, #tpu.memory_space<vmem>>, vector<1x16x16xf32>
    %1 = vector.shape_cast %0 : vector<1x16x16xf32> to vector<16x16xf32>
    %2 = arith.truncf %1 : vector<16x16xf32> to vector<16x16xbf16>
    %c0_2 = arith.constant 0 : index
    %c0_3 = arith.constant 0 : index
    %3 = vector.load %arg2[%c0_2, %c0_3] : memref<16x128xbf16, #tpu.memory_space<vmem>>, vector<16x128xbf16>
    %cst = arith.constant dense<0.000000e+00> : vector<16x128xf32>
    %4 = tpu.matmul %2, %3, %cst {dimension_numbers = #tpu.dot_dimension_numbers<[1], [0], [0], [1], [0, 0, 1, 1], [], []>} : vector<16x16xbf16>, vector<16x128xbf16>, vector<16x128xf32> -> vector<16x128xf32>
    %c0_4 = arith.constant 0 : index
    %c0_5 = arith.constant 0 : index
    %5 = vector.load %arg3[%c0_4, %c0_5] : memref<1x128xf32, #tpu.memory_space<vmem>>, vector<1x128xf32>
    %6 = vector.broadcast %5 : vector<1x128xf32> to vector<16x128xf32>
    %7 = arith.addf %4, %6 : vector<16x128xf32>
    %8 = math.tanh %7 : vector<16x128xf32>
    %9 = arith.truncf %8 : vector<16x128xf32> to vector<16x128xbf16>
    %c0_6 = arith.constant 0 : index
    %c0_7 = arith.constant 0 : index
    %10 = vector.load %arg4[%c0_6, %c0_7] : memref<128x32xbf16, #tpu.memory_space<vmem>>, vector<128x32xbf16>
    %cst_8 = arith.constant dense<0.000000e+00> : vector<16x32xf32>
    %11 = tpu.matmul %9, %10, %cst_8 {dimension_numbers = #tpu.dot_dimension_numbers<[1], [0], [0], [1], [0, 0, 1, 1], [], []>} : vector<16x128xbf16>, vector<128x32xbf16>, vector<16x32xf32> -> vector<16x32xf32>
    %c0_9 = arith.constant 0 : index
    %c0_10 = arith.constant 0 : index
    %12 = vector.load %arg5[%c0_9, %c0_10] : memref<1x32xf32, #tpu.memory_space<vmem>>, vector<1x32xf32>
    %13 = vector.broadcast %12 : vector<1x32xf32> to vector<16x32xf32>
    %14 = arith.addf %11, %13 : vector<16x32xf32>
    %15 = math.tanh %14 : vector<16x32xf32>
    %c0_11 = arith.constant 0 : index
    %c0_12 = arith.constant 0 : index
    %16 = vector.load %arg6[%c0_11, %c0_12] : memref<16x32xf32, #tpu.memory_space<vmem>>, vector<16x32xf32>
    tpu.vector_store %arg6[%c0_11, %c0_12], %15 {strides = array<i32>} : memref<16x32xf32, #tpu.memory_space<vmem>>, vector<16x32xf32>,
    return
  }
  func.func @transform_0(%arg0: i32) -> (i32, i32, i32) {
    %c7_i32 = arith.constant 7 : i32
    %c0_i32 = arith.constant 0 : i32
    %c0_i32_0 = arith.constant 0 : i32
    return %c7_i32, %arg0, %c0_i32 : i32, i32, i32
  }
  func.func @transform_1(%arg0: i32) -> (i32, i32) {
    %c0_i32 = arith.constant 0 : i32
    %c0_i32_0 = arith.constant 0 : i32
    %c0_i32_1 = arith.constant 0 : i32
    return %c0_i32, %c0_i32_0 : i32, i32
  }
  func.func @transform_2(%arg0: i32) -> (i32, i32) {
    %c0_i32 = arith.constant 0 : i32
    %c0_i32_0 = arith.constant 0 : i32
    %c0_i32_1 = arith.constant 0 : i32
    return %c0_i32, %c0_i32_0 : i32, i32
  }
  func.func @transform_3(%arg0: i32) -> (i32, i32) {
    %c0_i32 = arith.constant 0 : i32
    %c0_i32_0 = arith.constant 0 : i32
    %c0_i32_1 = arith.constant 0 : i32
    return %c0_i32, %c0_i32_0 : i32, i32
  }
  func.func @transform_4(%arg0: i32) -> (i32, i32) {
    %c0_i32 = arith.constant 0 : i32
    %c0_i32_0 = arith.constant 0 : i32
    %c0_i32_1 = arith.constant 0 : i32
    return %c0_i32, %c0_i32_0 : i32, i32
  }
  func.func @transform_5(%arg0: i32) -> (i32, i32) {
    %c0_i32 = arith.constant 0 : i32
    %c0_i32_0 = arith.constant 0 : i32
    return %arg0, %c0_i32 : i32, i32
  }
}

module attributes {stable_mosaic.version = 11 : i64} {
  func.func @_mlp_encoder_kernel(%arg0: i32, %arg1: memref<1x16x16xf32, #tpu.memory_space<vmem>>, %arg2: memref<16x128xbf16, #tpu.memory_space<vmem>>, %arg3: memref<1x128xf32, #tpu.memory_space<vmem>>, %arg4: memref<128x32xbf16, #tpu.memory_space<vmem>>, %arg5: memref<1x32xf32, #tpu.memory_space<vmem>>, %arg6: memref<16x32xf32, #tpu.memory_space<vmem>>) attributes {dimension_semantics = [#tpu.dimension_semantics<parallel>], iteration_bounds = array<i64: 1>, scalar_prefetch = 0 : i64, scratch_operands = 0 : i64, tpu.core_type = #tpu.core_type<tc>, window_params = [{transform_indices = @transform_0, window_bounds = array<i64: 1, 16, 16>}, {pipeline_mode = #tpu.pipeline_mode<synchronous>, transform_indices = @transform_1, window_bounds = array<i64: 16, 128>}, {pipeline_mode = #tpu.pipeline_mode<synchronous>, transform_indices = @transform_2, window_bounds = array<i64: 1, 128>}, {pipeline_mode = #tpu.pipeline_mode<synchronous>, transform_indices = @transform_3, window_bounds = array<i64: 128, 32>}, {pipeline_mode = #tpu.pipeline_mode<synchronous>, transform_indices = @transform_4, window_bounds = array<i64: 1, 32>}, {transform_indices = @transform_5, window_bounds = array<i64: 16, 32>}]} {
    %c0 = arith.constant 0 : index
    %c0_0 = arith.constant 0 : index
    %c0_1 = arith.constant 0 : index
    %0 = vector.load %arg1[%c0, %c0_0, %c0_1] : memref<1x16x16xf32, #tpu.memory_space<vmem>>, vector<1x16x16xf32>
    %1 = vector.shape_cast %0 : vector<1x16x16xf32> to vector<16x16xf32>
    %2 = arith.truncf %1 : vector<16x16xf32> to vector<16x16xbf16>
    %c0_2 = arith.constant 0 : index
    %c0_3 = arith.constant 0 : index
    %3 = vector.load %arg2[%c0_2, %c0_3] : memref<16x128xbf16, #tpu.memory_space<vmem>>, vector<16x128xbf16>
    %cst = arith.constant dense<0.000000e+00> : vector<16x128xf32>
    %4 = tpu.matmul %2, %3, %cst {dimension_numbers = #tpu.dot_dimension_numbers<[1], [0], [0], [1], [0, 0, 1, 1], [], []>} : vector<16x16xbf16>, vector<16x128xbf16>, vector<16x128xf32> -> vector<16x128xf32>
    %c0_4 = arith.constant 0 : index
    %c0_5 = arith.constant 0 : index
    %5 = vector.load %arg3[%c0_4, %c0_5] : memref<1x128xf32, #tpu.memory_space<vmem>>, vector<1x128xf32>
    %6 = vector.broadcast %5 : vector<1x128xf32> to vector<16x128xf32>
    %7 = arith.addf %4, %6 : vector<16x128xf32>
    %8 = math.tanh %7 : vector<16x128xf32>
    %9 = arith.truncf %8 : vector<16x128xf32> to vector<16x128xbf16>
    %c0_6 = arith.constant 0 : index
    %c0_7 = arith.constant 0 : index
    %10 = vector.load %arg4[%c0_6, %c0_7] : memref<128x32xbf16, #tpu.memory_space<vmem>>, vector<128x32xbf16>
    %cst_8 = arith.constant dense<0.000000e+00> : vector<16x32xf32>
    %11 = tpu.matmul %9, %10, %cst_8 {dimension_numbers = #tpu.dot_dimension_numbers<[1], [0], [0], [1], [0, 0, 1, 1], [], []>} : vector<16x128xbf16>, vector<128x32xbf16>, vector<16x32xf32> -> vector<16x32xf32>
    %c0_9 = arith.constant 0 : index
    %c0_10 = arith.constant 0 : index
    %12 = vector.load %arg5[%c0_9, %c0_10] : memref<1x32xf32, #tpu.memory_space<vmem>>, vector<1x32xf32>
    %13 = vector.broadcast %12 : vector<1x32xf32> to vector<16x32xf32>
    %14 = arith.addf %11, %13 : vector<16x32xf32>
    %15 = math.tanh %14 : vector<16x32xf32>
    %c0_11 = arith.constant 0 : index
    %c0_12 = arith.constant 0 : index
    %16 = vector.load %arg6[%c0_11, %c0_12] : memref<16x32xf32, #tpu.memory_space<vmem>>, vector<16x32xf32>
    tpu.vector_store %arg6[%c0_11, %c0_12], %15 {strides = array<i32>} : memref<16x32xf32, #tpu.memory_space<vmem>>, vector<16x32xf32>,
    return
  }
  func.func @transform_0(%arg0: i32) -> (i32, i32, i32) {
    %c7_i32 = arith.constant 7 : i32
    %c0_i32 = arith.constant 0 : i32
    %c0_i32_0 = arith.constant 0 : i32
    return %c7_i32, %arg0, %c0_i32 : i32, i32, i32
  }
  func.func @transform_1(%arg0: i32) -> (i32, i32) {
    %c0_i32 = arith.constant 0 : i32
    %c0_i32_0 = arith.constant 0 : i32
    %c0_i32_1 = arith.constant 0 : i32
    return %c0_i32, %c0_i32_0 : i32, i32
  }
  func.func @transform_2(%arg0: i32) -> (i32, i32) {
    %c0_i32 = arith.constant 0 : i32
    %c0_i32_0 = arith.constant 0 : i32
    %c0_i32_1 = arith.constant 0 : i32
    return %c0_i32, %c0_i32_0 : i32, i32
  }
  func.func @transform_3(%arg0: i32) -> (i32, i32) {
    %c0_i32 = arith.constant 0 : i32
    %c0_i32_0 = arith.constant 0 : i32
    %c0_i32_1 = arith.constant 0 : i32
    return %c0_i32, %c0_i32_0 : i32, i32
  }
  func.func @transform_4(%arg0: i32) -> (i32, i32) {
    %c0_i32 = arith.constant 0 : i32
    %c0_i32_0 = arith.constant 0 : i32
    %c0_i32_1 = arith.constant 0 : i32
    return %c0_i32, %c0_i32_0 : i32, i32
  }
  func.func @transform_5(%arg0: i32) -> (i32, i32) {
    %c0_i32 = arith.constant 0 : i32
    %c0_i32_0 = arith.constant 0 : i32
    return %arg0, %c0_i32 : i32, i32
  }
}

</mosaic_0001>

<llo_original>
// kernel: tpu_custom_call.1
$region0: #{tpu_custom_call.1}
  #allocation0 [shape = 'u32[]', space=smem, size = 0x4, offset = 0x4, fixed_abs, tag = 'smem constant byte address 0x4 - core index']
  #allocation1 [shape = 'u32[144,128]{1,0:T(1,128)}', space=vmem, size = 0x12000, scoped, tag = 'internal scratch']
  %s0 = inlined_call_operand.vmem [shape: f32[8,2,16], index: 0, kind: input, shape index: {}]
  %s1 = inlined_call_operand.vmem [shape: bf16[16,128], index: 1, kind: input, shape index: {}]
  %s2 = inlined_call_operand.vmem [shape: f32[1,128], index: 2, kind: input, shape index: {}]
  %s3 = inlined_call_operand.vmem [shape: bf16[128,32], index: 3, kind: input, shape index: {}]
  %s4 = inlined_call_operand.vmem [shape: f32[1,32], index: 4, kind: input, shape index: {}]
  %s5 = inlined_call_operand.hbm [shape: f32[2,32], index: 5, kind: output, shape index: {}]
  %s6 = sld [smem:[#allocation0]]
  $region30: #{tpu_custom_call.1} parent=0
    _
  %s8 = ssub.s32 1, %s6
  %s9 = scalar_select 0, %s8, %s6
  $region1: #{tpu_custom_call.1} parent=0
    #allocation2 [shape = 'u8[8192]{0}', space=vmem, size = 0x2000, scoped, tag = 'output window, operand 0, single buffered']
    #allocation3 [shape = 's32[1]{0}', space=sflag, size = 0x4, scoped, tag = 'scoped memory for tpu_custom_call.1']
    %10 = vsyncpa [#allocation3], 0
    // Predicated region
    $region2: #{tpu_custom_call.1} parent=1 // pred_check
      _
    $region3: #{tpu_custom_call.1} parent=1 // pred_check_branch
      %12 = sbr.rel (0) target = $region5
    $region4: #{tpu_custom_call.1} parent=1 // pred_region
      %s13 = scalar_lea.vmem %s0, 14
    $region5: #{tpu_custom_call.1} parent=1 // pred_fallthru
      _
    // Predicated region
    $region6: #{tpu_custom_call.1} parent=1 // pred_check
      _
    $region7: #{tpu_custom_call.1} parent=1 // pred_check_branch
      %15 = sbr.rel (0) target = $region9
    $region8: #{tpu_custom_call.1} parent=1 // pred_region
      _
    $region9: #{tpu_custom_call.1} parent=1 // pred_fallthru
      _
    // Predicated region
    $region10: #{tpu_custom_call.1} parent=1 // pred_check
      _
    $region11: #{tpu_custom_call.1} parent=1 // pred_check_branch
      %17 = sbr.rel (0) target = $region13
    $region12: #{tpu_custom_call.1} parent=1 // pred_region
      _
    $region13: #{tpu_custom_call.1} parent=1 // pred_fallthru
      _
    // Predicated region
    $region14: #{tpu_custom_call.1} parent=1 // pred_check
      _
    $region15: #{tpu_custom_call.1} parent=1 // pred_check_branch
      %19 = sbr.rel (0) target = $region17
    $region16: #{tpu_custom_call.1} parent=1 // pred_region
      _
    $region17: #{tpu_custom_call.1} parent=1 // pred_fallthru
      _
    // Predicated region
    $region18: #{tpu_custom_call.1} parent=1 // pred_check
      _
    $region19: #{tpu_custom_call.1} parent=1 // pred_check_branch
      %21 = sbr.rel (0) target = $region21
    $region20: #{tpu_custom_call.1} parent=1 // pred_region
      _
    $region21: #{tpu_custom_call.1} parent=1 // pred_fallthru
      _
    %s22 = scalar_lea.vmem %s0, 14
    %s23 = scalar_lea.vmem %s0, 14
    %v25 = vld [vmem:[%s23] sm:$0xff]
    %v26 = vld [vmem:[%s23 + $0x8] sm:$0xff]
    %v27 = vpack.c.bf16 %v26, %v25
    %v28 = vld [vmem:[%s1] sm:$0xf]
    %v29 = vld [vmem:[%s1 + $0x4] sm:$0xf]
    %v30 = vld [vmem:[%s2] sm:$0x1]
    %v32 = vlaneseq
    %v33 = vshrl.u32 %v32, 7
    %v34 = vsub.s32 0, %v33
    %v35 = vrot.slane %v30, %v34
    %v39 = vunpack.c.l.b16 %v28
    %v40 = vunpack.c.l.b16 %v29
    %v41 = vpack.c.b16 %v40, %v39
    %vm43 = vcmask 130048
    %v45 = vsel %vm43, %v27, 0
    %47 = vmatprep.subr.bf16.mxu0 0
    %48 = vmatpush1.bf16.msra.mxu0 %v41
    %49 = vmatprep.subr.bf16.mxu0 0
    %50 = vmatpush1.bf16.msra.mxu0 0
    %51 = vmatprep.subr.bf16.mxu0 0
    %52 = vmatpush1.bf16.msra.mxu0 0
    %53 = vmatprep.subr.bf16.mxu0 0
    %54 = vmatpush1.bf16.msra.mxu0 0
    %55 = vmatprep.subr.bf16.mxu0 0
    %56 = vmatpush1.bf16.msra.mxu0 0
    %57 = vmatprep.subr.bf16.mxu0 0
    %58 = vmatpush1.bf16.msra.mxu0 0
    %59 = vmatprep.subr.bf16.mxu0 0
    %60 = vmatpush1.bf16.msra.mxu0 0
    %61 = vmatprep.subr.bf16.mxu0 0
    %62 = vmatpush1.bf16.msra.mxu0 0
    %63 = vmatprep.subr.bf16.mxu0 0
    %64 = vmatpush1.bf16.msra.mxu0 0
    %65 = vmatprep.subr.bf16.mxu0 0
    %66 = vmatpush1.bf16.msra.mxu0 0
    %67 = vmatprep.subr.bf16.mxu0 0
    %68 = vmatpush1.bf16.msra.mxu0 0
    %69 = vmatprep.subr.bf16.mxu0 0
    %70 = vmatpush1.bf16.msra.mxu0 0
    %71 = vmatprep.subr.bf16.mxu0 0
    %72 = vmatpush1.bf16.msra.mxu0 0
    %73 = vmatprep.subr.bf16.mxu0 0
    %74 = vmatpush1.bf16.msra.mxu0 0
    %75 = vmatprep.subr.bf16.mxu0 0
    %76 = vmatpush1.bf16.msra.mxu0 0
    %77 = vmatprep.subr.bf16.mxu0 0
    %78 = vmatpush1.bf16.msra.mxu0 0
    %79 = vmatprep.mubr.bf16.mxu0 0
    %80 = vmatmul.mubr.bf16.gmra.mrb[0].mxu0 %v45
    %v81 = vpop.f32.mrb[0].mxu0
    %v82 = vadd.f32 %v35, %v81
    %v83 = vpop.f32.mrb[0].mxu0
    %v84 = vpop.f32.mrb[0].mxu0
    %v85 = vadd.f32 %v35, %v84
    %v86 = vpop.f32.mrb[0].mxu0
    %87 = vdwg.mxu0
    %v88 = vtanh.pop %v82
    %v89 = vtanh.pop %v85
    %v90 = vpack.c.bf16 %v89, %v88
    %v91 = vld [vmem:[%s3] sm:$0xf]
    %v92 = vld [vmem:[%s3 + $0x4] sm:$0xf]
    %v93 = vld [vmem:[%s3 + $0x8] sm:$0xf]
    %v94 = vld [vmem:[%s3 + $0xc] sm:$0xf]
    %v95 = vld [vmem:[%s3 + $0x10] sm:$0xf]
    %v96 = vld [vmem:[%s3 + $0x14] sm:$0xf]
    %v97 = vld [vmem:[%s3 + $0x18] sm:$0xf]
    %v98 = vld [vmem:[%s3 + $0x1c] sm:$0xf]
    %v99 = vld [vmem:[%s3 + $0x20] sm:$0xf]
    %v100 = vld [vmem:[%s3 + $0x24] sm:$0xf]
    %v101 = vld [vmem:[%s3 + $0x28] sm:$0xf]
    %v102 = vld [vmem:[%s3 + $0x2c] sm:$0xf]
    %v103 = vld [vmem:[%s3 + $0x30] sm:$0xf]
    %v104 = vld [vmem:[%s3 + $0x34] sm:$0xf]
    %v105 = vld [vmem:[%s3 + $0x38] sm:$0xf]
    %v106 = vld [vmem:[%s3 + $0x3c] sm:$0xf]
    %v107 = vld [vmem:[%s4] sm:$0x1]
    %v109 = vlaneseq
    %v110 = vshrl.u32 %v109, 7
    %v111 = vsub.s32 0, %v110
    %v112 = vrot.slane %v107, %v111
    %v130 = vunpack.c.l.b16 %v91
    %v131 = vunpack.c.l.b16 %v92
    %v132 = vunpack.c.l.b16 %v93
    %v133 = vunpack.c.l.b16 %v94
    %v134 = vunpack.c.l.b16 %v95
    %v135 = vunpack.c.l.b16 %v96
    %v136 = vunpack.c.l.b16 %v97
    %v137 = vunpack.c.l.b16 %v98
    %v138 = vunpack.c.l.b16 %v99
    %v139 = vunpack.c.l.b16 %v100
    %v140 = vunpack.c.l.b16 %v101
    %v141 = vunpack.c.l.b16 %v102
    %v142 = vunpack.c.l.b16 %v103
    %v143 = vunpack.c.l.b16 %v104
    %v144 = vunpack.c.l.b16 %v105
    %v145 = vunpack.c.l.b16 %v106
    %v146 = vpack.c.b16 %v131, %v130
    %v147 = vpack.c.b16 %v133, %v132
    %v148 = vpack.c.b16 %v135, %v134
    %v149 = vpack.c.b16 %v137, %v136
    %v150 = vpack.c.b16 %v139, %v138
    %v151 = vpack.c.b16 %v141, %v140
    %v152 = vpack.c.b16 %v143, %v142
    %v153 = vpack.c.b16 %v145, %v144
    %162 = vmatprep.subr.bf16.mxu0 0
    %163 = vmatpush1.bf16.msra.mxu0 %v146
    %164 = vmatprep.subr.bf16.mxu0 0
    %165 = vmatpush1.bf16.msra.mxu0 %v147
    %166 = vmatprep.subr.bf16.mxu0 0
    %167 = vmatpush1.bf16.msra.mxu0 %v148
    %168 = vmatprep.subr.bf16.mxu0 0
    %169 = vmatpush1.bf16.msra.mxu0 %v149
    %170 = vmatprep.subr.bf16.mxu0 0
    %171 = vmatpush1.bf16.msra.mxu0 %v150
    %172 = vmatprep.subr.bf16.mxu0 0
    %173 = vmatpush1.bf16.msra.mxu0 %v151
    %174 = vmatprep.subr.bf16.mxu0 0
    %175 = vmatpush1.bf16.msra.mxu0 %v152
    %176 = vmatprep.subr.bf16.mxu0 0
    %177 = vmatpush1.bf16.msra.mxu0 %v153
    %178 = vmatprep.subr.bf16.mxu0 0
    %179 = vmatpush1.bf16.msra.mxu0 0
    %180 = vmatprep.subr.bf16.mxu0 0
    %181 = vmatpush1.bf16.msra.mxu0 0
    %182 = vmatprep.subr.bf16.mxu0 0
    %183 = vmatpush1.bf16.msra.mxu0 0
    %184 = vmatprep.subr.bf16.mxu0 0
    %185 = vmatpush1.bf16.msra.mxu0 0
    %186 = vmatprep.subr.bf16.mxu0 0
    %187 = vmatpush1.bf16.msra.mxu0 0
    %188 = vmatprep.subr.bf16.mxu0 0
    %189 = vmatpush1.bf16.msra.mxu0 0
    %190 = vmatprep.subr.bf16.mxu0 0
    %191 = vmatpush1.bf16.msra.mxu0 0
    %192 = vmatprep.subr.bf16.mxu0 0
    %193 = vmatpush1.bf16.msra.mxu0 0
    %194 = vmatprep.mubr.bf16.mxu0 0
    %195 = vmatmul.mubr.bf16.gmra.mrb[0].mxu0 %v90
    %v196 = vpop.f32.mrb[0].mxu0
    %v197 = vadd.f32 %v112, %v196
    %v198 = vpop.f32.mrb[0].mxu0
    %v199 = vpop.f32.mrb[0].mxu0
    %v200 = vadd.f32 %v112, %v199
    %v201 = vpop.f32.mrb[0].mxu0
    %202 = vdwg.mxu0
    %v203 = vtanh.pop %v197
    %v204 = vtanh.pop %v200
    %vm205 = vcmask 261120
    %206 = vst.msk [vmem:[#allocation2] sm:$0xff] %vm205, %v203
    %207 = vst.msk [vmem:[#allocation2 + $0x8] sm:$0xff] %vm205, %v204
    // Predicated region
    $region22: #{tpu_custom_call.1} parent=1 // pred_check
      _
    $region23: #{tpu_custom_call.1} parent=1 // pred_check_branch
      %209 = sbr.rel (0) target = $region25
    $region24: #{tpu_custom_call.1} parent=1 // pred_region
      %s211 = ssub.s32 256, 32
      %212 = vsyncadd [#allocation3], %s211
      %s213 = sshll.u32 [#allocation2], 4
      %s214 = int_to_ptr.vmem [resolvable:$true] %s213
      %219 = dma.vmem_to_hbm [thread:$0]  %s214, 32, %s5, [#allocation3], 32, 32, 2
    $region25: #{tpu_custom_call.1} parent=1 // pred_fallthru
      _
    // Predicated region
    $region26: #{tpu_custom_call.1} parent=1 // pred_check
      _
    $region27: #{tpu_custom_call.1} parent=1 // pred_check_branch
      %221 = sbr.rel (0) target = $region29
    $region28: #{tpu_custom_call.1} parent=1 // pred_region
      %222 = dma.done [#allocation3], 256
    $region29: #{tpu_custom_call.1} parent=1 // pred_fallthru
      _
    %223 = vsyncpa [#allocation3], 1

// kernel: tpu_custom_call.1
$region0: #{tpu_custom_call.1}
  #allocation0 [shape = 'u32[]', space=smem, size = 0x4, offset = 0x4, fixed_abs, tag = 'smem constant byte address 0x4 - core index']
  #allocation1 [shape = 'u32[144,128]{1,0:T(1,128)}', space=vmem, size = 0x12000, scoped, tag = 'internal scratch']
  %s0 = inlined_call_operand.vmem [shape: f32[8,2,16], index: 0, kind: input, shape index: {}]
  %s1 = inlined_call_operand.vmem [shape: bf16[16,128], index: 1, kind: input, shape index: {}]
  %s2 = inlined_call_operand.vmem [shape: f32[1,128], index: 2, kind: input, shape index: {}]
  %s3 = inlined_call_operand.vmem [shape: bf16[128,32], index: 3, kind: input, shape index: {}]
  %s4 = inlined_call_operand.vmem [shape: f32[1,32], index: 4, kind: input, shape index: {}]
  %s5 = inlined_call_operand.hbm [shape: f32[2,32], index: 5, kind: output, shape index: {}]
  %s6 = sld [smem:[#allocation0]]
  $region30: #{tpu_custom_call.1} parent=0
    _
  %s8 = ssub.s32 1, %s6
  %s9 = scalar_select 0, %s8, %s6
  $region1: #{tpu_custom_call.1} parent=0
    #allocation2 [shape = 'u8[8192]{0}', space=vmem, size = 0x2000, scoped, tag = 'output window, operand 0, single buffered']
    #allocation3 [shape = 's32[1]{0}', space=sflag, size = 0x4, scoped, tag = 'scoped memory for tpu_custom_call.1']
    %10 = vsyncpa [#allocation3], 0
    // Predicated region
    $region2: #{tpu_custom_call.1} parent=1 // pred_check
      _
    $region3: #{tpu_custom_call.1} parent=1 // pred_check_branch
      %12 = sbr.rel (0) target = $region5
    $region4: #{tpu_custom_call.1} parent=1 // pred_region
      %s13 = scalar_lea.vmem %s0, 14
    $region5: #{tpu_custom_call.1} parent=1 // pred_fallthru
      _
    // Predicated region
    $region6: #{tpu_custom_call.1} parent=1 // pred_check
      _
    $region7: #{tpu_custom_call.1} parent=1 // pred_check_branch
      %15 = sbr.rel (0) target = $region9
    $region8: #{tpu_custom_call.1} parent=1 // pred_region
      _
    $region9: #{tpu_custom_call.1} parent=1 // pred_fallthru
      _
    // Predicated region
    $region10: #{tpu_custom_call.1} parent=1 // pred_check
      _
    $region11: #{tpu_custom_call.1} parent=1 // pred_check_branch
      %17 = sbr.rel (0) target = $region13
    $region12: #{tpu_custom_call.1} parent=1 // pred_region
      _
    $region13: #{tpu_custom_call.1} parent=1 // pred_fallthru
      _
    // Predicated region
    $region14: #{tpu_custom_call.1} parent=1 // pred_check
      _
    $region15: #{tpu_custom_call.1} parent=1 // pred_check_branch
      %19 = sbr.rel (0) target = $region17
    $region16: #{tpu_custom_call.1} parent=1 // pred_region
      _
    $region17: #{tpu_custom_call.1} parent=1 // pred_fallthru
      _
    // Predicated region
    $region18: #{tpu_custom_call.1} parent=1 // pred_check
      _
    $region19: #{tpu_custom_call.1} parent=1 // pred_check_branch
      %21 = sbr.rel (0) target = $region21
    $region20: #{tpu_custom_call.1} parent=1 // pred_region
      _
    $region21: #{tpu_custom_call.1} parent=1 // pred_fallthru
      _
    %s22 = scalar_lea.vmem %s0, 14
    %s23 = scalar_lea.vmem %s0, 14
    %v25 = vld [vmem:[%s23] sm:$0xff]
    %v26 = vld [vmem:[%s23 + $0x8] sm:$0xff]
    %v27 = vpack.c.bf16 %v26, %v25
    %v28 = vld [vmem:[%s1] sm:$0xf]
    %v29 = vld [vmem:[%s1 + $0x4] sm:$0xf]
    %v30 = vld [vmem:[%s2] sm:$0x1]
    %v32 = vlaneseq
    %v33 = vshrl.u32 %v32, 7
    %v34 = vsub.s32 0, %v33
    %v35 = vrot.slane %v30, %v34
    %v39 = vunpack.c.l.b16 %v28
    %v40 = vunpack.c.l.b16 %v29
    %v41 = vpack.c.b16 %v40, %v39
    %vm43 = vcmask 130048
    %v45 = vsel %vm43, %v27, 0
    %47 = vmatprep.subr.bf16.mxu0 0
    %48 = vmatpush1.bf16.msra.mxu0 %v41
    %49 = vmatprep.subr.bf16.mxu0 0
    %50 = vmatpush1.bf16.msra.mxu0 0
    %51 = vmatprep.subr.bf16.mxu0 0
    %52 = vmatpush1.bf16.msra.mxu0 0
    %53 = vmatprep.subr.bf16.mxu0 0
    %54 = vmatpush1.bf16.msra.mxu0 0
    %55 = vmatprep.subr.bf16.mxu0 0
    %56 = vmatpush1.bf16.msra.mxu0 0
    %57 = vmatprep.subr.bf16.mxu0 0
    %58 = vmatpush1.bf16.msra.mxu0 0
    %59 = vmatprep.subr.bf16.mxu0 0
    %60 = vmatpush1.bf16.msra.mxu0 0
    %61 = vmatprep.subr.bf16.mxu0 0
    %62 = vmatpush1.bf16.msra.mxu0 0
    %63 = vmatprep.subr.bf16.mxu0 0
    %64 = vmatpush1.bf16.msra.mxu0 0
    %65 = vmatprep.subr.bf16.mxu0 0
    %66 = vmatpush1.bf16.msra.mxu0 0
    %67 = vmatprep.subr.bf16.mxu0 0
    %68 = vmatpush1.bf16.msra.mxu0 0
    %69 = vmatprep.subr.bf16.mxu0 0
    %70 = vmatpush1.bf16.msra.mxu0 0
    %71 = vmatprep.subr.bf16.mxu0 0
    %72 = vmatpush1.bf16.msra.mxu0 0
    %73 = vmatprep.subr.bf16.mxu0 0
    %74 = vmatpush1.bf16.msra.mxu0 0
    %75 = vmatprep.subr.bf16.mxu0 0
    %76 = vmatpush1.bf16.msra.mxu0 0
    %77 = vmatprep.subr.bf16.mxu0 0
    %78 = vmatpush1.bf16.msra.mxu0 0
    %79 = vmatprep.mubr.bf16.mxu0 0
    %80 = vmatmul.mubr.bf16.gmra.mrb[0].mxu0 %v45
    %v81 = vpop.f32.mrb[0].mxu0
    %v82 = vadd.f32 %v35, %v81
    %v83 = vpop.f32.mrb[0].mxu0
    %v84 = vpop.f32.mrb[0].mxu0
    %v85 = vadd.f32 %v35, %v84
    %v86 = vpop.f32.mrb[0].mxu0
    %87 = vdwg.mxu0
    %v88 = vtanh.pop %v82
    %v89 = vtanh.pop %v85
    %v90 = vpack.c.bf16 %v89, %v88
    %v91 = vld [vmem:[%s3] sm:$0xf]
    %v92 = vld [vmem:[%s3 + $0x4] sm:$0xf]
    %v93 = vld [vmem:[%s3 + $0x8] sm:$0xf]
    %v94 = vld [vmem:[%s3 + $0xc] sm:$0xf]
    %v95 = vld [vmem:[%s3 + $0x10] sm:$0xf]
    %v96 = vld [vmem:[%s3 + $0x14] sm:$0xf]
    %v97 = vld [vmem:[%s3 + $0x18] sm:$0xf]
    %v98 = vld [vmem:[%s3 + $0x1c] sm:$0xf]
    %v99 = vld [vmem:[%s3 + $0x20] sm:$0xf]
    %v100 = vld [vmem:[%s3 + $0x24] sm:$0xf]
    %v101 = vld [vmem:[%s3 + $0x28] sm:$0xf]
    %v102 = vld [vmem:[%s3 + $0x2c] sm:$0xf]
    %v103 = vld [vmem:[%s3 + $0x30] sm:$0xf]
    %v104 = vld [vmem:[%s3 + $0x34] sm:$0xf]
    %v105 = vld [vmem:[%s3 + $0x38] sm:$0xf]
    %v106 = vld [vmem:[%s3 + $0x3c] sm:$0xf]
    %v107 = vld [vmem:[%s4] sm:$0x1]
    %v109 = vlaneseq
    %v110 = vshrl.u32 %v109, 7
    %v111 = vsub.s32 0, %v110
    %v112 = vrot.slane %v107, %v111
    %v130 = vunpack.c.l.b16 %v91
    %v131 = vunpack.c.l.b16 %v92
    %v132 = vunpack.c.l.b16 %v93
    %v133 = vunpack.c.l.b16 %v94
    %v134 = vunpack.c.l.b16 %v95
    %v135 = vunpack.c.l.b16 %v96
    %v136 = vunpack.c.l.b16 %v97
    %v137 = vunpack.c.l.b16 %v98
    %v138 = vunpack.c.l.b16 %v99
    %v139 = vunpack.c.l.b16 %v100
    %v140 = vunpack.c.l.b16 %v101
    %v141 = vunpack.c.l.b16 %v102
    %v142 = vunpack.c.l.b16 %v103
    %v143 = vunpack.c.l.b16 %v104
    %v144 = vunpack.c.l.b16 %v105
    %v145 = vunpack.c.l.b16 %v106
    %v146 = vpack.c.b16 %v131, %v130
    %v147 = vpack.c.b16 %v133, %v132
    %v148 = vpack.c.b16 %v135, %v134
    %v149 = vpack.c.b16 %v137, %v136
    %v150 = vpack.c.b16 %v139, %v138
    %v151 = vpack.c.b16 %v141, %v140
    %v152 = vpack.c.b16 %v143, %v142
    %v153 = vpack.c.b16 %v145, %v144
    %162 = vmatprep.subr.bf16.mxu0 0
    %163 = vmatpush1.bf16.msra.mxu0 %v146
    %164 = vmatprep.subr.bf16.mxu0 0
    %165 = vmatpush1.bf16.msra.mxu0 %v147
    %166 = vmatprep.subr.bf16.mxu0 0
    %167 = vmatpush1.bf16.msra.mxu0 %v148
    %168 = vmatprep.subr.bf16.mxu0 0
    %169 = vmatpush1.bf16.msra.mxu0 %v149
    %170 = vmatprep.subr.bf16.mxu0 0
    %171 = vmatpush1.bf16.msra.mxu0 %v150
    %172 = vmatprep.subr.bf16.mxu0 0
    %173 = vmatpush1.bf16.msra.mxu0 %v151
    %174 = vmatprep.subr.bf16.mxu0 0
    %175 = vmatpush1.bf16.msra.mxu0 %v152
    %176 = vmatprep.subr.bf16.mxu0 0
    %177 = vmatpush1.bf16.msra.mxu0 %v153
    %178 = vmatprep.subr.bf16.mxu0 0
    %179 = vmatpush1.bf16.msra.mxu0 0
    %180 = vmatprep.subr.bf16.mxu0 0
    %181 = vmatpush1.bf16.msra.mxu0 0
    %182 = vmatprep.subr.bf16.mxu0 0
    %183 = vmatpush1.bf16.msra.mxu0 0
    %184 = vmatprep.subr.bf16.mxu0 0
    %185 = vmatpush1.bf16.msra.mxu0 0
    %186 = vmatprep.subr.bf16.mxu0 0
    %187 = vmatpush1.bf16.msra.mxu0 0
    %188 = vmatprep.subr.bf16.mxu0 0
    %189 = vmatpush1.bf16.msra.mxu0 0
    %190 = vmatprep.subr.bf16.mxu0 0
    %191 = vmatpush1.bf16.msra.mxu0 0
    %192 = vmatprep.subr.bf16.mxu0 0
    %193 = vmatpush1.bf16.msra.mxu0 0
    %194 = vmatprep.mubr.bf16.mxu0 0
    %195 = vmatmul.mubr.bf16.gmra.mrb[0].mxu0 %v90
    %v196 = vpop.f32.mrb[0].mxu0
    %v197 = vadd.f32 %v112, %v196
    %v198 = vpop.f32.mrb[0].mxu0
    %v199 = vpop.f32.mrb[0].mxu0
    %v200 = vadd.f32 %v112, %v199
    %v201 = vpop.f32.mrb[0].mxu0
    %202 = vdwg.mxu0
    %v203 = vtanh.pop %v197
    %v204 = vtanh.pop %v200
    %vm205 = vcmask 261120
    %206 = vst.msk [vmem:[#allocation2] sm:$0xff] %vm205, %v203
    %207 = vst.msk [vmem:[#allocation2 + $0x8] sm:$0xff] %vm205, %v204
    // Predicated region
    $region22: #{tpu_custom_call.1} parent=1 // pred_check
      _
    $region23: #{tpu_custom_call.1} parent=1 // pred_check_branch
      %209 = sbr.rel (0) target = $region25
    $region24: #{tpu_custom_call.1} parent=1 // pred_region
      %s211 = ssub.s32 256, 32
      %212 = vsyncadd [#allocation3], %s211
      %s213 = sshll.u32 [#allocation2], 4
      %s214 = int_to_ptr.vmem [resolvable:$true] %s213
      %219 = dma.vmem_to_hbm [thread:$0]  %s214, 32, %s5, [#allocation3], 32, 32, 2
    $region25: #{tpu_custom_call.1} parent=1 // pred_fallthru
      _
    // Predicated region
    $region26: #{tpu_custom_call.1} parent=1 // pred_check
      _
    $region27: #{tpu_custom_call.1} parent=1 // pred_check_branch
      %221 = sbr.rel (0) target = $region29
    $region28: #{tpu_custom_call.1} parent=1 // pred_region
      %222 = dma.done [#allocation3], 256
    $region29: #{tpu_custom_call.1} parent=1 // pred_fallthru
      _
    %223 = vsyncpa [#allocation3], 1

</llo_original>
